<compile_context>
chip_gen: v7x
topology: tpu7x:2x2x1
jax: 0.10.0
libtpu: 0.0.40
codegen_flags: <defaults>
</compile_context>

<pallas_src>
import numpy as np

import jax
import jax.numpy as jnp
from jax.experimental import pallas as pl
from jax.experimental.pallas import tpu as pltpu


def _inner_product_kernel(x_ref, sl_ref, sr_ref, red_ref, o_ref):
    # x_ref:   (tb, F*D)   native dtype
    # sl_ref:  (F*D, P*D)  f32 0/1 selector for the "left"  field of each pair
    # sr_ref:  (F*D, P*D)  f32 0/1 selector for the "right" field of each pair
    # red_ref: (P*D, P)    f32 block-diagonal ones (per-pair sum over D)
    # o_ref:   (tb, P)
    x = x_ref[...].astype(jnp.float32)  # upcast after load; accumulate in f32
    p = jnp.dot(x, sl_ref[...], preferred_element_type=jnp.float32)  # (tb, P*D)
    q = jnp.dot(x, sr_ref[...], preferred_element_type=jnp.float32)  # (tb, P*D)
    o_ref[...] = jnp.dot(
        p * q, red_ref[...], preferred_element_type=jnp.float32
    ).astype(o_ref.dtype)


def _build_selectors(num_fields, embed_dim):
    """Constant 0/1 matrices encoding the (i<j) nested-loop pair order."""
    F, D = num_fields, embed_dim
    P = F * (F - 1) // 2
    sl = np.zeros((F * D, P * D), dtype=np.float32)
    sr = np.zeros((F * D, P * D), dtype=np.float32)
    red = np.zeros((P * D, P), dtype=np.float32)
    eye = np.eye(D, dtype=np.float32)
    p = 0
    for i in range(F):
        for j in range(i + 1, F):
            sl[i * D:(i + 1) * D, p * D:(p + 1) * D] = eye
            sr[j * D:(j + 1) * D, p * D:(p + 1) * D] = eye
            red[p * D:(p + 1) * D, p] = 1.0
            p += 1
    return jnp.asarray(sl), jnp.asarray(sr), jnp.asarray(red)


def inner_product_layer(x, *, batch_tile=1024):
    """x: (B, F, D) -> (B, F*(F-1)//2), same dtype as x (f32 accumulation)."""
    B, F, D = x.shape
    P = F * (F - 1) // 2
    FD, PD = F * D, P * D

    # Free contiguous reshape: kills the (F, D) minor-dim tiling padding.
    x2 = x.reshape(B, FD)
    sl, sr, red = _build_selectors(F, D)

    # Batch tile: multiple of 8 (sublane quantum), clamped for small B.
    # With the flat layout a 1024-row f32 block is only ~FD*4 KiB in flight,
    # far under every generation's scoped-VMEM limit.
    tb = max(8, min((int(batch_tile) // 8) * 8, ((B + 7) // 8) * 8))
    grid = (pl.cdiv(B, tb),)  # ragged trailing block is masked; no jnp.pad

    out = pl.pallas_call(
        _inner_product_kernel,
        out_shape=jax.ShapeDtypeStruct((B, P), x.dtype),
        grid_spec=pltpu.PrefetchScalarGridSpec(
            num_scalar_prefetch=0,
            grid=grid,
            in_specs=[
                # Batch tiled; flat feature dim stays whole (== full array dim).
                pl.BlockSpec((tb, FD), lambda b: (b, 0)),
                # Constant selector blocks: same block index every step ->
                # DMA'd once, resident in VMEM for the rest of the grid.
                pl.BlockSpec((FD, PD), lambda b: (0, 0)),
                pl.BlockSpec((FD, PD), lambda b: (0, 0)),
                pl.BlockSpec((PD, P), lambda b: (0, 0)),
            ],
            out_specs=pl.BlockSpec((tb, P), lambda b: (b, 0)),
        ),
        compiler_params=pltpu.CompilerParams(
            dimension_semantics=("parallel",),  # batch -> both TCs on v7x
        ),
    )(x2, sl, sr, red)

    return out


if __name__ == "__main__":
    # Small deterministic config consistent with the module's forward.
    batch = 16
    num_fields = 4
    embed_dim = 16
    num_pairs = num_fields * (num_fields - 1) // 2

    key = jax.random.PRNGKey(0)
    x = jax.random.normal(key, (batch, num_fields, embed_dim), dtype=jnp.float32)

    out = jax.block_until_ready(inner_product_layer(x))

    # Pure-JAX reference mirroring the PyTorch module.
    idx1, idx2 = [], []
    for i in range(num_fields):
        for j in range(i + 1, num_fields):
            idx1.append(i)
            idx2.append(j)
    p = x[:, jnp.asarray(idx1), :]
    q = x[:, jnp.asarray(idx2), :]
    ref = jnp.sum(p * q, axis=-1)

    assert out.shape == (batch, num_pairs), out.shape
    assert jnp.allclose(out, ref, atol=1e-5, rtol=1e-5), (out, ref)

    print("KERNEL_OK")
</pallas_src>

<mosaic_0001>
module attributes {stable_mosaic.version = 11 : i64} {
  func.func @_inner_product_kernel(%arg0: i32, %arg1: memref<16x64xf32, #tpu.memory_space<vmem>>, %arg2: memref<64x96xf32, #tpu.memory_space<vmem>>, %arg3: memref<64x96xf32, #tpu.memory_space<vmem>>, %arg4: memref<96x6xf32, #tpu.memory_space<vmem>>, %arg5: memref<16x6xf32, #tpu.memory_space<vmem>>) attributes {dimension_semantics = [#tpu.dimension_semantics<parallel>], iteration_bounds = array<i64: 1>, scalar_prefetch = 0 : i64, scratch_operands = 0 : i64, tpu.core_type = #tpu.core_type<tc>, window_params = [{transform_indices = @transform_0, window_bounds = array<i64: 16, 64>}, {pipeline_mode = #tpu.pipeline_mode<synchronous>, transform_indices = @transform_1, window_bounds = array<i64: 64, 96>}, {pipeline_mode = #tpu.pipeline_mode<synchronous>, transform_indices = @transform_2, window_bounds = array<i64: 64, 96>}, {pipeline_mode = #tpu.pipeline_mode<synchronous>, transform_indices = @transform_3, window_bounds = array<i64: 96, 6>}, {transform_indices = @transform_4, window_bounds = array<i64: 16, 6>}]} {
    %c0 = arith.constant 0 : index
    %c0_0 = arith.constant 0 : index
    %0 = vector.load %arg1[%c0, %c0_0] : memref<16x64xf32, #tpu.memory_space<vmem>>, vector<16x64xf32>
    %c0_1 = arith.constant 0 : index
    %c0_2 = arith.constant 0 : index
    %1 = vector.load %arg2[%c0_1, %c0_2] : memref<64x96xf32, #tpu.memory_space<vmem>>, vector<64x96xf32>
    %cst = arith.constant dense<0.000000e+00> : vector<16x96xf32>
    %2 = tpu.matmul %0, %1, %cst {dimension_numbers = #tpu.dot_dimension_numbers<[1], [0], [0], [1], [0, 0, 1, 1], [], []>} : vector<16x64xf32>, vector<64x96xf32>, vector<16x96xf32> -> vector<16x96xf32>
    %c0_3 = arith.constant 0 : index
    %c0_4 = arith.constant 0 : index
    %3 = vector.load %arg3[%c0_3, %c0_4] : memref<64x96xf32, #tpu.memory_space<vmem>>, vector<64x96xf32>
    %cst_5 = arith.constant dense<0.000000e+00> : vector<16x96xf32>
    %4 = tpu.matmul %0, %3, %cst_5 {dimension_numbers = #tpu.dot_dimension_numbers<[1], [0], [0], [1], [0, 0, 1, 1], [], []>} : vector<16x64xf32>, vector<64x96xf32>, vector<16x96xf32> -> vector<16x96xf32>
    %5 = arith.mulf %2, %4 : vector<16x96xf32>
    %c0_6 = arith.constant 0 : index
    %c0_7 = arith.constant 0 : index
    %6 = vector.load %arg4[%c0_6, %c0_7] : memref<96x6xf32, #tpu.memory_space<vmem>>, vector<96x6xf32>
    %cst_8 = arith.constant dense<0.000000e+00> : vector<16x6xf32>
    %7 = tpu.matmul %5, %6, %cst_8 {dimension_numbers = #tpu.dot_dimension_numbers<[1], [0], [0], [1], [0, 0, 1, 1], [], []>} : vector<16x96xf32>, vector<96x6xf32>, vector<16x6xf32> -> vector<16x6xf32>
    %c0_9 = arith.constant 0 : index
    %c0_10 = arith.constant 0 : index
    %8 = vector.load %arg5[%c0_9, %c0_10] : memref<16x6xf32, #tpu.memory_space<vmem>>, vector<16x6xf32>
    tpu.vector_store %arg5[%c0_9, %c0_10], %7 {strides = array<i32>} : memref<16x6xf32, #tpu.memory_space<vmem>>, vector<16x6xf32>,
    return
  }
  func.func @transform_0(%arg0: i32) -> (i32, i32) {
    %c0_i32 = arith.constant 0 : i32
    %c0_i32_0 = arith.constant 0 : i32
    return %arg0, %c0_i32 : i32, i32
  }
  func.func @transform_1(%arg0: i32) -> (i32, i32) {
    %c0_i32 = arith.constant 0 : i32
    %c0_i32_0 = arith.constant 0 : i32
    %c0_i32_1 = arith.constant 0 : i32
    return %c0_i32, %c0_i32_0 : i32, i32
  }
  func.func @transform_2(%arg0: i32) -> (i32, i32) {
    %c0_i32 = arith.constant 0 : i32
    %c0_i32_0 = arith.constant 0 : i32
    %c0_i32_1 = arith.constant 0 : i32
    return %c0_i32, %c0_i32_0 : i32, i32
  }
  func.func @transform_3(%arg0: i32) -> (i32, i32) {
    %c0_i32 = arith.constant 0 : i32
    %c0_i32_0 = arith.constant 0 : i32
    %c0_i32_1 = arith.constant 0 : i32
    return %c0_i32, %c0_i32_0 : i32, i32
  }
  func.func @transform_4(%arg0: i32) -> (i32, i32) {
    %c0_i32 = arith.constant 0 : i32
    %c0_i32_0 = arith.constant 0 : i32
    return %arg0, %c0_i32 : i32, i32
  }
}

</mosaic_0001>

<llo_original>
// kernel: tpu_custom_call.1
$region0: #{tpu_custom_call.1}
  #allocation0 [shape = 'u32[]', space=smem, size = 0x4, offset = 0x4, fixed_abs, tag = 'smem constant byte address 0x4 - core index']
  #allocation1 [shape = 'u32[144,128]{1,0:T(1,128)}', space=vmem, size = 0x12000, scoped, tag = 'internal scratch']
  %s0 = inlined_call_operand.vmem [shape: f32[16,64], index: 0, kind: input, shape index: {}]
  %s1 = inlined_call_operand.vmem [shape: f32[64,96], index: 1, kind: input, shape index: {}]
  %s2 = inlined_call_operand.hbm [shape: f32[64,96], index: 2, kind: input, shape index: {}]
  %s3 = inlined_call_operand.vmem [shape: f32[96,6], index: 3, kind: input, shape index: {}]
  %s4 = inlined_call_operand.vmem [shape: f32[16,6], index: 4, kind: output, shape index: {}]
  %s5 = sld [smem:[#allocation0]]
  $region30: #{tpu_custom_call.1} parent=0
    _
  %s7 = ssub.s32 1, %s5
  %s8 = scalar_select 0, %s7, %s5
  $region1: #{tpu_custom_call.1} parent=0
    #allocation2 [shape = 'u8[32768]{0}', space=vmem, size = 0x8000, scoped, tag = 'input window, operand 2, single buffered']
    #allocation3 [shape = 's32[1]{0}', space=sflag, size = 0x4, scoped, tag = 'scoped memory for tpu_custom_call.1']
    %9 = vsyncpa [#allocation3], 0
    // Predicated region
    $region2: #{tpu_custom_call.1} parent=1 // pred_check
      _
    $region3: #{tpu_custom_call.1} parent=1 // pred_check_branch
      %11 = sbr.rel (0) target = $region5
    $region4: #{tpu_custom_call.1} parent=1 // pred_region
      _
    $region5: #{tpu_custom_call.1} parent=1 // pred_fallthru
      _
    // Predicated region
    $region6: #{tpu_custom_call.1} parent=1 // pred_check
      _
    $region7: #{tpu_custom_call.1} parent=1 // pred_check_branch
      %13 = sbr.rel (0) target = $region9
    $region8: #{tpu_custom_call.1} parent=1 // pred_region
      _
    $region9: #{tpu_custom_call.1} parent=1 // pred_fallthru
      _
    // Predicated region
    $region10: #{tpu_custom_call.1} parent=1 // pred_check
      _
    $region11: #{tpu_custom_call.1} parent=1 // pred_check_branch
      %15 = sbr.rel (0) target = $region13
    $region12: #{tpu_custom_call.1} parent=1 // pred_region
      %s17 = ssub.s32 1024, 1024
      %18 = vsyncadd [#allocation3], %s17
      %s19 = sshll.u32 [#allocation2], 4
      %s20 = int_to_ptr.vmem [resolvable:$true] %s19
      %25 = dma.hbm_to_vmem [thread:$0]  %s2, 1024, %s20, [#allocation3], 128, 128, 8
    $region13: #{tpu_custom_call.1} parent=1 // pred_fallthru
      _
    // Predicated region
    $region14: #{tpu_custom_call.1} parent=1 // pred_check
      _
    $region15: #{tpu_custom_call.1} parent=1 // pred_check_branch
      %27 = sbr.rel (0) target = $region17
    $region16: #{tpu_custom_call.1} parent=1 // pred_region
      _
    $region17: #{tpu_custom_call.1} parent=1 // pred_fallthru
      _
    // Predicated region
    $region18: #{tpu_custom_call.1} parent=1 // pred_check
      _
    $region19: #{tpu_custom_call.1} parent=1 // pred_check_branch
      %29 = sbr.rel (0) target = $region21
    $region20: #{tpu_custom_call.1} parent=1 // pred_region
      %30 = dma.done [#allocation3], 1024
    $region21: #{tpu_custom_call.1} parent=1 // pred_fallthru
      _
    %v31 = vld [vmem:[%s0] sm:$0xff]
    %v32 = vld [vmem:[%s0 + $0x8] sm:$0xff]
    %v33 = vld [vmem:[%s1] sm:$0xff]
    %v34 = vld [vmem:[%s1 + $0x8] sm:$0xff]
    %v35 = vld [vmem:[%s1 + $0x10] sm:$0xff]
    %v36 = vld [vmem:[%s1 + $0x18] sm:$0xff]
    %v37 = vld [vmem:[%s1 + $0x20] sm:$0xff]
    %v38 = vld [vmem:[%s1 + $0x28] sm:$0xff]
    %v39 = vld [vmem:[%s1 + $0x30] sm:$0xff]
    %v40 = vld [vmem:[%s1 + $0x38] sm:$0xff]
    %vm41 = vcmask 523264
    %v43 = vsel %vm41, %v31, 0
    %v46 = vsel %vm41, %v32, 0
    %48 = vmatprep.subr.mxu0 0.0
    %49 = vmatpush1.msra.mxu0 %v33
    %50 = vmatprep.subr.mxu0 0.0
    %51 = vmatpush1.msra.mxu0 %v34
    %52 = vmatprep.subr.mxu0 0.0
    %53 = vmatpush1.msra.mxu0 %v35
    %54 = vmatprep.subr.mxu0 0.0
    %55 = vmatpush1.msra.mxu0 %v36
    %56 = vmatprep.subr.mxu0 0.0
    %57 = vmatpush1.msra.mxu0 %v37
    %58 = vmatprep.subr.mxu0 0.0
    %59 = vmatpush1.msra.mxu0 %v38
    %60 = vmatprep.subr.mxu0 0.0
    %61 = vmatpush1.msra.mxu0 %v39
    %62 = vmatprep.subr.mxu0 0.0
    %63 = vmatpush1.msra.mxu0 %v40
    %64 = vmatprep.subr.mxu0 0.0
    %65 = vmatpush1.msra.mxu0 0.0
    %66 = vmatprep.subr.mxu0 0.0
    %67 = vmatpush1.msra.mxu0 0.0
    %68 = vmatprep.subr.mxu0 0.0
    %69 = vmatpush1.msra.mxu0 0.0
    %70 = vmatprep.subr.mxu0 0.0
    %71 = vmatpush1.msra.mxu0 0.0
    %72 = vmatprep.subr.mxu0 0.0
    %73 = vmatpush1.msra.mxu0 0.0
    %74 = vmatprep.subr.mxu0 0.0
    %75 = vmatpush1.msra.mxu0 0.0
    %76 = vmatprep.subr.mxu0 0.0
    %77 = vmatpush1.msra.mxu0 0.0
    %78 = vmatprep.subr.mxu0 0.0
    %79 = vmatpush1.msra.mxu0 0.0
    %80 = vmatprep.subr.mxu0 0.0
    %81 = vmatpush1.msra.mxu0 0.0
    %82 = vmatprep.subr.mxu0 0.0
    %83 = vmatpush1.msra.mxu0 0.0
    %84 = vmatprep.subr.mxu0 0.0
    %85 = vmatpush1.msra.mxu0 0.0
    %86 = vmatprep.subr.mxu0 0.0
    %87 = vmatpush1.msra.mxu0 0.0
    %88 = vmatprep.subr.mxu0 0.0
    %89 = vmatpush1.msra.mxu0 0.0
    %90 = vmatprep.subr.mxu0 0.0
    %91 = vmatpush1.msra.mxu0 0.0
    %92 = vmatprep.subr.mxu0 0.0
    %93 = vmatpush1.msra.mxu0 0.0
    %94 = vmatprep.subr.mxu0 0.0
    %95 = vmatpush1.msra.mxu0 0.0
    %96 = vmatprep.subr.mxu0 0.0
    %97 = vmatpush1.msra.mxu0 0.0
    %98 = vmatprep.subr.mxu0 0.0
    %99 = vmatpush1.msra.mxu0 0.0
    %100 = vmatprep.subr.mxu0 0.0
    %101 = vmatpush1.msra.mxu0 0.0
    %102 = vmatprep.subr.mxu0 0.0
    %103 = vmatpush1.msra.mxu0 0.0
    %104 = vmatprep.subr.mxu0 0.0
    %105 = vmatpush1.msra.mxu0 0.0
    %106 = vmatprep.subr.mxu0 0.0
    %107 = vmatpush1.msra.mxu0 0.0
    %108 = vmatprep.subr.mxu0 0.0
    %109 = vmatpush1.msra.mxu0 0.0
    %110 = vmatprep.subr.mxu0 0.0
    %111 = vmatpush1.msra.mxu0 0.0
    %112 = vmatprep.mubr.f32.mxu0 0.0
    %113 = vmatmul.mubr.f32.gmra.mrb[0].mxu0 %v43
    %v114 = vpop.f32.mrb[0].mxu0
    %v115 = vadd.f32 0.0, %v114
    %v116 = vpop.f32.mrb[0].mxu0
    %117 = vmatprep.mubr.f32.mxu0 0.0
    %118 = vmatmul.mubr.f32.gmra.mrb[0].mxu0 %v46
    %v119 = vpop.f32.mrb[0].mxu0
    %v120 = vadd.f32 0.0, %v119
    %v121 = vpop.f32.mrb[0].mxu0
    %122 = vdwg.mxu0
    %v123 = vld [vmem:[#allocation2] sm:$0xff]
    %v124 = vld [vmem:[#allocation2 + $0x8] sm:$0xff]
    %v125 = vld [vmem:[#allocation2 + $0x10] sm:$0xff]
    %v126 = vld [vmem:[#allocation2 + $0x18] sm:$0xff]
    %v127 = vld [vmem:[#allocation2 + $0x20] sm:$0xff]
    %v128 = vld [vmem:[#allocation2 + $0x28] sm:$0xff]
    %v129 = vld [vmem:[#allocation2 + $0x30] sm:$0xff]
    %v130 = vld [vmem:[#allocation2 + $0x38] sm:$0xff]
    %131 = vmatprep.subr.mxu0 0.0
    %132 = vmatpush1.msra.mxu0 %v123
    %133 = vmatprep.subr.mxu0 0.0
    %134 = vmatpush1.msra.mxu0 %v124
    %135 = vmatprep.subr.mxu0 0.0
    %136 = vmatpush1.msra.mxu0 %v125
    %137 = vmatprep.subr.mxu0 0.0
    %138 = vmatpush1.msra.mxu0 %v126
    %139 = vmatprep.subr.mxu0 0.0
    %140 = vmatpush1.msra.mxu0 %v127
    %141 = vmatprep.subr.mxu0 0.0
    %142 = vmatpush1.msra.mxu0 %v128
    %143 = vmatprep.subr.mxu0 0.0
    %144 = vmatpush1.msra.mxu0 %v129
    %145 = vmatprep.subr.mxu0 0.0
    %146 = vmatpush1.msra.mxu0 %v130
    %147 = vmatprep.subr.mxu0 0.0
    %148 = vmatpush1.msra.mxu0 0.0
    %149 = vmatprep.subr.mxu0 0.0
    %150 = vmatpush1.msra.mxu0 0.0
    %151 = vmatprep.subr.mxu0 0.0
    %152 = vmatpush1.msra.mxu0 0.0
    %153 = vmatprep.subr.mxu0 0.0
    %154 = vmatpush1.msra.mxu0 0.0
    %155 = vmatprep.subr.mxu0 0.0
    %156 = vmatpush1.msra.mxu0 0.0
    %157 = vmatprep.subr.mxu0 0.0
    %158 = vmatpush1.msra.mxu0 0.0
    %159 = vmatprep.subr.mxu0 0.0
    %160 = vmatpush1.msra.mxu0 0.0
    %161 = vmatprep.subr.mxu0 0.0
    %162 = vmatpush1.msra.mxu0 0.0
    %163 = vmatprep.subr.mxu0 0.0
    %164 = vmatpush1.msra.mxu0 0.0
    %165 = vmatprep.subr.mxu0 0.0
    %166 = vmatpush1.msra.mxu0 0.0
    %167 = vmatprep.subr.mxu0 0.0
    %168 = vmatpush1.msra.mxu0 0.0
    %169 = vmatprep.subr.mxu0 0.0
    %170 = vmatpush1.msra.mxu0 0.0
    %171 = vmatprep.subr.mxu0 0.0
    %172 = vmatpush1.msra.mxu0 0.0
    %173 = vmatprep.subr.mxu0 0.0
    %174 = vmatpush1.msra.mxu0 0.0
    %175 = vmatprep.subr.mxu0 0.0
    %176 = vmatpush1.msra.mxu0 0.0
    %177 = vmatprep.subr.mxu0 0.0
    %178 = vmatpush1.msra.mxu0 0.0
    %179 = vmatprep.subr.mxu0 0.0
    %180 = vmatpush1.msra.mxu0 0.0
    %181 = vmatprep.subr.mxu0 0.0
    %182 = vmatpush1.msra.mxu0 0.0
    %183 = vmatprep.subr.mxu0 0.0
    %184 = vmatpush1.msra.mxu0 0.0
    %185 = vmatprep.subr.mxu0 0.0
    %186 = vmatpush1.msra.mxu0 0.0
    %187 = vmatprep.subr.mxu0 0.0
    %188 = vmatpush1.msra.mxu0 0.0
    %189 = vmatprep.subr.mxu0 0.0
    %190 = vmatpush1.msra.mxu0 0.0
    %191 = vmatprep.subr.mxu0 0.0
    %192 = vmatpush1.msra.mxu0 0.0
    %193 = vmatprep.subr.mxu0 0.0
    %194 = vmatpush1.msra.mxu0 0.0
    %195 = vmatprep.mubr.f32.mxu0 0.0
    %196 = vmatmul.mubr.f32.gmra.mrb[0].mxu0 %v43
    %v197 = vpop.f32.mrb[0].mxu0
    %v198 = vadd.f32 0.0, %v197
    %v199 = vpop.f32.mrb[0].mxu0
    %200 = vmatprep.mubr.f32.mxu0 0.0
    %201 = vmatmul.mubr.f32.gmra.mrb[0].mxu0 %v46
    %v202 = vpop.f32.mrb[0].mxu0
    %v203 = vadd.f32 0.0, %v202
    %v204 = vpop.f32.mrb[0].mxu0
    %205 = vdwg.mxu0
    %v206 = vmul.f32 %v115, %v198
    %v207 = vmul.f32 %v120, %v203
    %v208 = vld [vmem:[%s3] sm:$0xff]
    %v209 = vld [vmem:[%s3 + $0x8] sm:$0xff]
    %v210 = vld [vmem:[%s3 + $0x10] sm:$0xff]
    %v211 = vld [vmem:[%s3 + $0x18] sm:$0xff]
    %v212 = vld [vmem:[%s3 + $0x20] sm:$0xff]
    %v213 = vld [vmem:[%s3 + $0x28] sm:$0xff]
    %v214 = vld [vmem:[%s3 + $0x30] sm:$0xff]
    %v215 = vld [vmem:[%s3 + $0x38] sm:$0xff]
    %v216 = vld [vmem:[%s3 + $0x40] sm:$0xff]
    %v217 = vld [vmem:[%s3 + $0x48] sm:$0xff]
    %v218 = vld [vmem:[%s3 + $0x50] sm:$0xff]
    %v219 = vld [vmem:[%s3 + $0x58] sm:$0xff]
    %vm220 = vcmask 785408
    %v222 = vsel %vm220, %v206, 0
    %v225 = vsel %vm220, %v207, 0
    %227 = vmatprep.subr.mxu0 0.0
    %228 = vmatpush1.msra.mxu0 %v208
    %229 = vmatprep.subr.mxu0 0.0
    %230 = vmatpush1.msra.mxu0 %v209
    %231 = vmatprep.subr.mxu0 0.0
    %232 = vmatpush1.msra.mxu0 %v210
    %233 = vmatprep.subr.mxu0 0.0
    %234 = vmatpush1.msra.mxu0 %v211
    %235 = vmatprep.subr.mxu0 0.0
    %236 = vmatpush1.msra.mxu0 %v212
    %237 = vmatprep.subr.mxu0 0.0
    %238 = vmatpush1.msra.mxu0 %v213
    %239 = vmatprep.subr.mxu0 0.0
    %240 = vmatpush1.msra.mxu0 %v214
    %241 = vmatprep.subr.mxu0 0.0
    %242 = vmatpush1.msra.mxu0 %v215
    %243 = vmatprep.subr.mxu0 0.0
    %244 = vmatpush1.msra.mxu0 %v216
    %245 = vmatprep.subr.mxu0 0.0
    %246 = vmatpush1.msra.mxu0 %v217
    %247 = vmatprep.subr.mxu0 0.0
    %248 = vmatpush1.msra.mxu0 %v218
    %249 = vmatprep.subr.mxu0 0.0
    %250 = vmatpush1.msra.mxu0 %v219
    %251 = vmatprep.subr.mxu0 0.0
    %252 = vmatpush1.msra.mxu0 0.0
    %253 = vmatprep.subr.mxu0 0.0
    %254 = vmatpush1.msra.mxu0 0.0
    %255 = vmatprep.subr.mxu0 0.0
    %256 = vmatpush1.msra.mxu0 0.0
    %257 = vmatprep.subr.mxu0 0.0
    %258 = vmatpush1.msra.mxu0 0.0
    %259 = vmatprep.subr.mxu0 0.0
    %260 = vmatpush1.msra.mxu0 0.0
    %261 = vmatprep.subr.mxu0 0.0
    %262 = vmatpush1.msra.mxu0 0.0
    %263 = vmatprep.subr.mxu0 0.0
    %264 = vmatpush1.msra.mxu0 0.0
    %265 = vmatprep.subr.mxu0 0.0
    %266 = vmatpush1.msra.mxu0 0.0
    %267 = vmatprep.subr.mxu0 0.0
    %268 = vmatpush1.msra.mxu0 0.0
    %269 = vmatprep.subr.mxu0 0.0
    %270 = vmatpush1.msra.mxu0 0.0
    %271 = vmatprep.subr.mxu0 0.0
    %272 = vmatpush1.msra.mxu0 0.0
    %273 = vmatprep.subr.mxu0 0.0
    %274 = vmatpush1.msra.mxu0 0.0
    %275 = vmatprep.subr.mxu0 0.0
    %276 = vmatpush1.msra.mxu0 0.0
    %277 = vmatprep.subr.mxu0 0.0
    %278 = vmatpush1.msra.mxu0 0.0
    %279 = vmatprep.subr.mxu0 0.0
    %280 = vmatpush1.msra.mxu0 0.0
    %281 = vmatprep.subr.mxu0 0.0
    %282 = vmatpush1.msra.mxu0 0.0
    %283 = vmatprep.subr.mxu0 0.0
    %284 = vmatpush1.msra.mxu0 0.0
    %285 = vmatprep.subr.mxu0 0.0
    %286 = vmatpush1.msra.mxu0 0.0
    %287 = vmatprep.subr.mxu0 0.0
    %288 = vmatpush1.msra.mxu0 0.0
    %289 = vmatprep.subr.mxu0 0.0
    %290 = vmatpush1.msra.mxu0 0.0
    %291 = vmatprep.mubr.f32.mxu0 0.0
    %292 = vmatmul.mubr.f32.gmra.mrb[0].mxu0 %v222
    %v293 = vpop.f32.mrb[0].mxu0
    %v294 = vadd.f32 0.0, %v293
    %v295 = vpop.f32.mrb[0].mxu0
    %296 = vmatprep.mubr.f32.mxu0 0.0
    %297 = vmatmul.mubr.f32.gmra.mrb[0].mxu0 %v225
    %v298 = vpop.f32.mrb[0].mxu0
    %v299 = vadd.f32 0.0, %v298
    %v300 = vpop.f32.mrb[0].mxu0
    %301 = vdwg.mxu0
    %vm302 = vcmask 48128
    %303 = vst.msk [vmem:[%s4] sm:$0xff] %vm302, %v294
    %304 = vst.msk [vmem:[%s4 + $0x8] sm:$0xff] %vm302, %v299
    // Predicated region
    $region22: #{tpu_custom_call.1} parent=1 // pred_check
      _
    $region23: #{tpu_custom_call.1} parent=1 // pred_check_branch
      %306 = sbr.rel (0) target = $region25
    $region24: #{tpu_custom_call.1} parent=1 // pred_region
      _
    $region25: #{tpu_custom_call.1} parent=1 // pred_fallthru
      _
    // Predicated region
    $region26: #{tpu_custom_call.1} parent=1 // pred_check
      _
    $region27: #{tpu_custom_call.1} parent=1 // pred_check_branch
      %308 = sbr.rel (0) target = $region29
    $region28: #{tpu_custom_call.1} parent=1 // pred_region
      _
    $region29: #{tpu_custom_call.1} parent=1 // pred_fallthru
      _
    %309 = vsyncpa [#allocation3], 1

</llo_original>
